<compile_context>
chip_gen: v6e
topology: v6e:2x2x1
jax: 0.10.0
libtpu: 0.0.40
codegen_flags: <defaults>
</compile_context>

<pallas_src>
import functools

import jax
import jax.numpy as jnp
from jax.experimental import pallas as pl
from jax.experimental.pallas import tpu as pltpu


# ---------------------------------------------------------------------------
# kernels
# ---------------------------------------------------------------------------
def _ce_single_kernel(tgt_ref, x_ref, out_ref, *, eps, tile_b, batch, num_classes):
    """One pass over the full class axis; one partial loss sum per batch tile."""
    x = x_ref[...].astype(jnp.float32)                          # (TB, C)
    t = tgt_ref[...]                                            # (TB, 1) int32

    # numerically-stable log-sum-exp
    m = jnp.max(x, axis=-1, keepdims=True)                      # (TB, 1)
    lse = m + jnp.log(jnp.sum(jnp.exp(x - m), axis=-1, keepdims=True))

    # gather of the target logit via iota compare (no dynamic gather)
    cls = jax.lax.broadcasted_iota(jnp.int32, x.shape, 1)
    x_t = jnp.sum(jnp.where(cls == t, x, 0.0), axis=-1, keepdims=True)

    # loss_i = lse - (1-eps)*x_t - (eps/C)*sum_j x_ij   (torch CE w/ smoothing)
    loss = lse - (1.0 - eps) * x_t
    if eps != 0.0:
        loss = loss - (eps / num_classes) * jnp.sum(x, axis=-1, keepdims=True)

    # ragged batch: only needed when B % tile_b != 0 (trace-time specialized;
    # the mask itself is only a (TB, 1) op, negligible vs the (TB, C) work)
    if batch % tile_b != 0:
        row = (jax.lax.broadcasted_iota(jnp.int32, (tile_b, 1), 0)
               + pl.program_id(0) * tile_b)
        loss = jnp.where(row < batch, loss, 0.0)

    out_ref[...] = jnp.reshape(jnp.sum(loss), (1, 1, 1))


def _ce_stream_kernel(tgt_ref, x_ref, out_ref, m_sc, s_sc, xt_sc, sx_sc,
                      *, eps, tile_b, tile_c, batch, num_classes):
    """Large-vocab path: class axis streamed with an online log-sum-exp."""
    i = pl.program_id(0)
    j = pl.program_id(1)
    last_j = pl.num_programs(1) - 1

    @pl.when(j == 0)
    def _():
        m_sc[...] = jnp.full_like(m_sc, -jnp.inf)
        s_sc[...] = jnp.zeros_like(s_sc)
        xt_sc[...] = jnp.zeros_like(xt_sc)
        sx_sc[...] = jnp.zeros_like(sx_sc)

    x = x_ref[...].astype(jnp.float32)                          # (TB, TC)
    t = tgt_ref[...]                                            # (TB, 1) int32

    # static lane iota; shift the cheap (TB,1) target side instead of adding
    # j*tile_c to the full (TB,TC) tile.
    iota = jax.lax.broadcasted_iota(jnp.int32, (tile_b, tile_c), 1)
    t_local = t - j * tile_c                                    # (TB, 1)

    # target-logit gather never needs a column mask: out-of-range t_local never
    # matches, and garbage edge columns sit at iota >= C - j*tc > t_local.
    xt_sc[...] += jnp.sum(jnp.where(iota == t_local, x, 0.0), axis=-1,
                          keepdims=True)

    def interior():
        # unmasked fast path (no column-edge work on interior tiles)
        m_new = jnp.maximum(m_sc[...], jnp.max(x, axis=-1, keepdims=True))
        s_sc[...] = (s_sc[...] * jnp.exp(m_sc[...] - m_new)
                     + jnp.sum(jnp.exp(x - m_new), axis=-1, keepdims=True))
        m_sc[...] = m_new
        if eps != 0.0:
            sx_sc[...] += jnp.sum(x, axis=-1, keepdims=True)

    def edge():
        valid = iota < (num_classes - j * tile_c)               # scalar rhs
        xm = jnp.where(valid, x, -jnp.inf)
        m_new = jnp.maximum(m_sc[...], jnp.max(xm, axis=-1, keepdims=True))
        p = jnp.where(valid, jnp.exp(x - m_new), 0.0)
        s_sc[...] = (s_sc[...] * jnp.exp(m_sc[...] - m_new)
                     + jnp.sum(p, axis=-1, keepdims=True))
        m_sc[...] = m_new
        if eps != 0.0:
            sx_sc[...] += jnp.sum(jnp.where(valid, x, 0.0), axis=-1,
                                  keepdims=True)

    if num_classes % tile_c == 0:
        interior()                                              # never any edge
    else:
        pl.when(j != last_j)(interior)
        pl.when(j == last_j)(edge)

    @pl.when(j == last_j)
    def _():
        lse = m_sc[...] + jnp.log(s_sc[...])
        loss = lse - (1.0 - eps) * xt_sc[...]
        if eps != 0.0:
            loss = loss - (eps / num_classes) * sx_sc[...]
        if batch % tile_b != 0:
            row = (jax.lax.broadcasted_iota(jnp.int32, (tile_b, 1), 0)
                   + i * tile_b)
            loss = jnp.where(row < batch, loss, 0.0)
        out_ref[...] = jnp.reshape(jnp.sum(loss), (1, 1, 1))


# ---------------------------------------------------------------------------
# tiling heuristics + wrapper
# ---------------------------------------------------------------------------
_BLOCK_BUDGET_BYTES = 4 * 1024 * 1024      # per logits block (x2 double buffer,
                                           # plus headroom for f32 temporaries)
_MAX_TILE_B = 4096                         # rows (was 1024); cap by bytes above
_VMEM_LIMIT_BYTES = 32 * 1024 * 1024       # fits v5e/v6e/v7x scoped/physical VMEM


def _round_up(x, m):
    return ((x + m - 1) // m) * m


def _cdiv(a, b):
    return -(-a // b)


def _choose_tiles(B, C, itemsize):
    sub = {1: 32, 2: 16, 4: 8}.get(itemsize, 8)    # sublane packing per dtype
    # size against the f32 working set: the kernel upcasts to f32, so sub-32-bit
    # inputs must not be allowed to double their footprint past the budget.
    work_itemsize = max(itemsize, 4)
    rows = _BLOCK_BUDGET_BYTES // max(1, C * work_itemsize)
    if rows >= sub:
        # full class axis in one block, as many rows as fit (cap 4096)
        tb = min(_MAX_TILE_B, (rows // sub) * sub)
        # keep at least 2 batch tiles whenever possible (v7x has 2 TensorCores
        # and the "parallel" batch axis is the only thing sharding across them)
        if B > sub:
            tb = min(tb, _round_up(_cdiv(B, 2), sub))
        tb = max(sub, min(tb, _round_up(B, sub)))
        tc = C
    else:
        # huge vocab: stream the class axis with an online log-sum-exp
        tb = 8 * sub
        tb = max(sub, min(tb, _round_up(B, sub)))
        tc = max(128, ((_BLOCK_BUDGET_BYTES // (tb * work_itemsize)) // 128) * 128)
        tc = min(tc, _round_up(C, 128))
    return tb, tc


def ce_loss(logits, targets, label_smoothing: float = 0.0, *,
            tile_b: int = None, tile_c: int = None):
    """Equivalent of CELoss(label_smoothing).forward(out=logits, batch=targets)."""
    B, C = logits.shape
    eps = float(label_smoothing)
    itemsize = jnp.dtype(logits.dtype).itemsize

    auto_tb, auto_tc = _choose_tiles(B, C, itemsize)
    tb = int(tile_b) if tile_b is not None else auto_tb
    tc = int(tile_c) if tile_c is not None else auto_tc

    num_b = pl.cdiv(B, tb)
    b_pad = num_b * tb

    # targets: padded to a whole number of tiles, streamed per batch tile
    tgt = targets.astype(jnp.int32).reshape(B)
    if b_pad != B:
        tgt = jnp.pad(tgt, (0, b_pad - B))
    tgt = tgt.reshape(b_pad, 1)
    # TODO(synk): lane-dense (num_b, tb) targets layout would avoid the 128x
    # lane pad / strided DMA writes, but needs an in-kernel relayout.

    if tc >= C:
        # ---- single pass over the class axis, batch axis fully parallel ----
        kernel = functools.partial(_ce_single_kernel, eps=eps, tile_b=tb,
                                   batch=B, num_classes=C)
        partials = pl.pallas_call(
            kernel,
            out_shape=jax.ShapeDtypeStruct((num_b, 1, 1), jnp.float32),
            grid=(num_b,),
            in_specs=[
                pl.BlockSpec((tb, 1), lambda i: (i, 0)),      # per-tile targets
                pl.BlockSpec((tb, C), lambda i: (i, 0)),      # logits tile
            ],
            out_specs=pl.BlockSpec((1, 1, 1), lambda i: (i, 0, 0)),
            compiler_params=pltpu.CompilerParams(
                dimension_semantics=("parallel",),
                vmem_limit_bytes=_VMEM_LIMIT_BYTES),
        )(tgt, logits)
    else:
        # ---- streamed class axis (large vocab), online log-sum-exp ----
        num_c = pl.cdiv(C, tc)
        kernel = functools.partial(_ce_stream_kernel, eps=eps, tile_b=tb,
                                   tile_c=tc, batch=B, num_classes=C)
        partials = pl.pallas_call(
            kernel,
            out_shape=jax.ShapeDtypeStruct((num_b, 1, 1), jnp.float32),
            grid=(num_b, num_c),
            in_specs=[
                pl.BlockSpec((tb, 1), lambda i, j: (i, 0)),   # per-tile targets
                pl.BlockSpec((tb, tc), lambda i, j: (i, j)),  # logits tile
            ],
            out_specs=pl.BlockSpec((1, 1, 1), lambda i, j: (i, 0, 0)),
            scratch_shapes=[pltpu.VMEM((tb, 1), jnp.float32)] * 4,
            compiler_params=pltpu.CompilerParams(
                dimension_semantics=("parallel", "arbitrary"),
                vmem_limit_bytes=_VMEM_LIMIT_BYTES),
        )(tgt, logits)

    # final partial-sum reduction and divide-by-B in plain JAX
    return jnp.sum(partials) / B


# ---------------------------------------------------------------------------
# pure-JAX reference (torch.nn.CrossEntropyLoss semantics)
# ---------------------------------------------------------------------------
def _ce_loss_ref(logits, targets, label_smoothing: float = 0.0):
    B, C = logits.shape
    logp = jax.nn.log_softmax(logits.astype(jnp.float32), axis=-1)
    nll = -jnp.take_along_axis(logp, targets.reshape(B, 1), axis=-1)[:, 0]
    smooth = -jnp.mean(logp, axis=-1)
    loss = (1.0 - label_smoothing) * nll + label_smoothing * smooth
    return jnp.sum(loss) / B


if __name__ == "__main__":
    key = jax.random.PRNGKey(0)
    k1, k2, k3, k4, k5, k6 = jax.random.split(key, 6)

    # ---- path 1: single class-pass kernel (auto tiles, exact batch) ----
    B, C = 8, 128
    logits = jax.random.normal(k1, (B, C), dtype=jnp.float32)
    targets = jax.random.randint(k2, (B,), 0, C, dtype=jnp.int32)

    out = ce_loss(logits, targets, label_smoothing=0.0)
    jax.block_until_ready(out)
    ref = _ce_loss_ref(logits, targets, 0.0)
    assert jnp.allclose(out, ref, atol=1e-5, rtol=1e-5), (out, ref)

    out_ls = ce_loss(logits, targets, label_smoothing=0.1)
    jax.block_until_ready(out_ls)
    ref_ls = _ce_loss_ref(logits, targets, 0.1)
    assert jnp.allclose(out_ls, ref_ls, atol=1e-5, rtol=1e-5), (out_ls, ref_ls)

    # ---- path 1b: ragged batch, multiple batch tiles (auto tiles) ----
    B1, C1 = 13, 128
    logits1 = jax.random.normal(k3, (B1, C1), dtype=jnp.float32)
    targets1 = jax.random.randint(k4, (B1,), 0, C1, dtype=jnp.int32)
    out1 = ce_loss(logits1, targets1, label_smoothing=0.1)
    jax.block_until_ready(out1)
    ref1 = _ce_loss_ref(logits1, targets1, 0.1)
    assert jnp.allclose(out1, ref1, atol=1e-5, rtol=1e-5), (out1, ref1)

    # ---- path 1c: bf16 input (upcast handled in-kernel) ----
    logits_bf = jax.random.normal(k5, (16, 256), dtype=jnp.bfloat16)
    targets_bf = jax.random.randint(k6, (16,), 0, 256, dtype=jnp.int32)
    out_bf = ce_loss(logits_bf, targets_bf, label_smoothing=0.1)
    jax.block_until_ready(out_bf)
    ref_bf = _ce_loss_ref(logits_bf, targets_bf, 0.1)
    assert jnp.allclose(out_bf, ref_bf, atol=1e-3, rtol=1e-3), (out_bf, ref_bf)

    # ---- path 2: streamed class axis + ragged batch/class edges ----
    B2, C2 = 13, 200
    logits2 = jax.random.normal(k3, (B2, C2), dtype=jnp.float32)
    targets2 = jax.random.randint(k4, (B2,), 0, C2, dtype=jnp.int32)
    out2 = ce_loss(logits2, targets2, label_smoothing=0.1, tile_b=8, tile_c=128)
    jax.block_until_ready(out2)
    ref2 = _ce_loss_ref(logits2, targets2, 0.1)
    assert jnp.allclose(out2, ref2, atol=1e-5, rtol=1e-5), (out2, ref2)

    out3 = ce_loss(logits2, targets2, label_smoothing=0.0, tile_b=8, tile_c=128)
    jax.block_until_ready(out3)
    ref3 = _ce_loss_ref(logits2, targets2, 0.0)
    assert jnp.allclose(out3, ref3, atol=1e-5, rtol=1e-5), (out3, ref3)

    print("KERNEL_OK")
</pallas_src>

<mosaic_0001>
module attributes {stable_mosaic.version = 11 : i64} {
  func.func @_ce_single_kernel(%arg0: i32, %arg1: memref<8x1xi32, #tpu.memory_space<vmem>>, %arg2: memref<8x128xf32, #tpu.memory_space<vmem>>, %arg3: memref<1x1x1xf32, #tpu.memory_space<vmem>>) attributes {dimension_semantics = [#tpu.dimension_semantics<parallel>], iteration_bounds = array<i64: 1>, scalar_prefetch = 0 : i64, scratch_operands = 0 : i64, tpu.core_type = #tpu.core_type<tc>, window_params = [{transform_indices = @transform_0, window_bounds = array<i64: 8, 1>}, {transform_indices = @transform_1, window_bounds = array<i64: 8, 128>}, {transform_indices = @transform_2, window_bounds = array<i64: 1, 1, 1>}]} {
    %c0 = arith.constant 0 : index
    %c0_0 = arith.constant 0 : index
    %0 = vector.load %arg2[%c0, %c0_0] : memref<8x128xf32, #tpu.memory_space<vmem>>, vector<8x128xf32>
    %c0_1 = arith.constant 0 : index
    %c0_2 = arith.constant 0 : index
    %1 = vector.load %arg1[%c0_1, %c0_2] : memref<8x1xi32, #tpu.memory_space<vmem>>, vector<8x1xi32>
    %cst = arith.constant dense<0xFF800000> : vector<8xf32>
    %2 = vector.multi_reduction <maximumf>, %0, %cst [1] : vector<8x128xf32> to vector<8xf32>
    %3 = vector.shape_cast %2 : vector<8xf32> to vector<8x1xf32>
    %4 = vector.broadcast %3 : vector<8x1xf32> to vector<8x128xf32>
    %5 = arith.subf %0, %4 : vector<8x128xf32>
    %6 = math.exp %5 : vector<8x128xf32>
    %cst_3 = arith.constant dense<0.000000e+00> : vector<8xf32>
    %7 = vector.multi_reduction <add>, %6, %cst_3 [1] : vector<8x128xf32> to vector<8xf32>
    %8 = vector.shape_cast %7 : vector<8xf32> to vector<8x1xf32>
    %9 = math.log %8 : vector<8x1xf32>
    %10 = arith.addf %3, %9 : vector<8x1xf32>
    %11 = tpu.iota {dimensions = array<i32: 1>} : vector<8x128xi32>
    %12 = vector.broadcast %1 : vector<8x1xi32> to vector<8x128xi32>
    %13 = arith.cmpi eq, %11, %12 : vector<8x128xi32>
    %cst_4 = arith.constant 0.000000e+00 : f32
    %14 = vector.broadcast %cst_4 : f32 to vector<8x128xf32>
    %15 = arith.select %13, %0, %14 : vector<8x128xi1>, vector<8x128xf32>
    %cst_5 = arith.constant dense<0.000000e+00> : vector<8xf32>
    %16 = vector.multi_reduction <add>, %15, %cst_5 [1] : vector<8x128xf32> to vector<8xf32>
    %17 = vector.shape_cast %16 : vector<8xf32> to vector<8x1xf32>
    %cst_6 = arith.constant 1.000000e+00 : f32
    %18 = vector.broadcast %cst_6 : f32 to vector<8x1xf32>
    %19 = arith.mulf %18, %17 : vector<8x1xf32>
    %20 = arith.subf %10, %19 : vector<8x1xf32>
    %21 = vector.shape_cast %20 : vector<8x1xf32> to vector<1x8x1xf32>
    %cst_7 = arith.constant dense<0.000000e+00> : vector<1xf32>
    %22 = vector.multi_reduction <add>, %21, %cst_7 [1, 2] : vector<1x8x1xf32> to vector<1xf32>
    %23 = vector.shape_cast %22 : vector<1xf32> to vector<1x1x1xf32>
    %24 = vector.extract %23[0, 0, 0] : f32 from vector<1x1x1xf32>
    %25 = vector.broadcast %24 : f32 to vector<1x1x1xf32>
    %c0_8 = arith.constant 0 : index
    %c0_9 = arith.constant 0 : index
    %c0_10 = arith.constant 0 : index
    %26 = vector.load %arg3[%c0_8, %c0_9, %c0_10] : memref<1x1x1xf32, #tpu.memory_space<vmem>>, vector<1x1x1xf32>
    tpu.vector_store %arg3[%c0_8, %c0_9, %c0_10], %25 {strides = array<i32>} : memref<1x1x1xf32, #tpu.memory_space<vmem>>, vector<1x1x1xf32>,
    return
  }
  func.func @transform_0(%arg0: i32) -> (i32, i32) {
    %c0_i32 = arith.constant 0 : i32
    %c0_i32_0 = arith.constant 0 : i32
    return %arg0, %c0_i32 : i32, i32
  }
  func.func @transform_1(%arg0: i32) -> (i32, i32) {
    %c0_i32 = arith.constant 0 : i32
    %c0_i32_0 = arith.constant 0 : i32
    return %arg0, %c0_i32 : i32, i32
  }
  func.func @transform_2(%arg0: i32) -> (i32, i32, i32) {
    %c0_i32 = arith.constant 0 : i32
    %c0_i32_0 = arith.constant 0 : i32
    %c0_i32_1 = arith.constant 0 : i32
    return %arg0, %c0_i32, %c0_i32_0 : i32, i32, i32
  }
}

</mosaic_0001>

<llo_original>
// kernel: tpu_custom_call.1
$region0: #{tpu_custom_call.1}
  #allocation0 [shape = 'u32[]', space=smem, size = 0x4, offset = 0x4, fixed_abs, tag = 'smem constant byte address 0x4 - core index']
  #allocation1 [shape = 'u32[144,128]{1,0:T(1,128)}', space=vmem, size = 0x12000, scoped, tag = 'internal scratch']
  %s0 = inlined_call_operand.vmem [shape: s32[8,1], index: 0, kind: input, shape index: {}]
  %s1 = inlined_call_operand.vmem [shape: f32[8,128], index: 1, kind: input, shape index: {}]
  %s2 = inlined_call_operand.hbm [shape: f32[1,1,1], index: 2, kind: output, shape index: {}]
  %s3 = sld [smem:[#allocation0]]
  $region18: #{tpu_custom_call.1} parent=0
    _
  %s5 = ssub.s32 1, %s3
  %s6 = scalar_select 0, %s5, %s3
  $region1: #{tpu_custom_call.1} parent=0
    #allocation2 [shape = 'u8[512]{0}', space=vmem, size = 0x400, scoped, tag = 'output window, operand 0, single buffered']
    #allocation3 [shape = 's32[1]{0}', space=sflag, size = 0x4, scoped, tag = 'scoped memory for tpu_custom_call.1']
    %7 = vsyncpa [#allocation3], 0
    // Predicated region
    $region2: #{tpu_custom_call.1} parent=1 // pred_check
      _
    $region3: #{tpu_custom_call.1} parent=1 // pred_check_branch
      %9 = sbr.rel (0) target = $region5
    $region4: #{tpu_custom_call.1} parent=1 // pred_region
      _
    $region5: #{tpu_custom_call.1} parent=1 // pred_fallthru
      _
    // Predicated region
    $region6: #{tpu_custom_call.1} parent=1 // pred_check
      _
    $region7: #{tpu_custom_call.1} parent=1 // pred_check_branch
      %11 = sbr.rel (0) target = $region9
    $region8: #{tpu_custom_call.1} parent=1 // pred_region
      _
    $region9: #{tpu_custom_call.1} parent=1 // pred_fallthru
      _
    %v12 = vld [vmem:[%s1] sm:$0xff]
    %v13 = vld [vmem:[%s0] sm:$0xff]
    %14 = vmax.xlane.f32.xlu0 %v12
    %v15 = vpop.xlane.xlu0 %14
    %v16 = vsub.f32 %v12, %v15
    %v17 = vmul.f32 %v16, 1.442695
    %v18 = vpow.pop %v17
    %19 = vadd.xlane.f32.xlu0 %v18
    %v20 = vpop.xlane.xlu0 %19
    %v21 = vlog2.pop %v20
    %v22 = vmul.f32 %v21, 0.6931472
    %v23 = vadd.f32 %v15, %v22
    %v24 = vlaneseq
    %v25 = vand.u32 %v24, 127
    %26 = vset.pattern.permute.xlu0 0
    %27 = vperm.xlu0 %26, %v13
    %v28 = vpop.permute.xlu0 %27
    %vm29 = vcmp.eq.s32.totalorder %v25, %v28
    %v30 = vsel %vm29, %v12, 0.0
    %31 = vadd.xlane.f32.xlu0 %v30
    %v32 = vpop.xlane.xlu0 %31
    %v33 = vsub.f32 %v23, %v32
    %vm34 = vcmask 7168
    %v35 = vsel %vm34, %v33, 0.0
    %36 = vadd.xlane.f32.xlu0 %v35
    %v37 = vpop.xlane.xlu0 %36
    %v38 = vrot.slane %v37, 4
    %v39 = vadd.f32 %v37, %v38
    %v40 = vrot.slane %v39, 2
    %v41 = vadd.f32 %v39, %v40
    %v42 = vrot.slane %v41, 1
    %v43 = vadd.f32 %v41, %v42
    %s44 = vtos %v43
    %v45 = vstv %s44
    %vm46 = vcmask 0
    %47 = vst.msk [vmem:[#allocation2] sm:$0x1] %vm46, %v45
    // Predicated region
    $region10: #{tpu_custom_call.1} parent=1 // pred_check
      _
    $region11: #{tpu_custom_call.1} parent=1 // pred_check_branch
      %49 = sbr.rel (0) target = $region13
    $region12: #{tpu_custom_call.1} parent=1 // pred_region
      %s51 = ssub.s32 16, 16
      %52 = vsyncadd [#allocation3], %s51
      %s54 = sshll.u32 [#allocation2], 4
      %s55 = int_to_ptr.vmem [resolvable:$true] %s54
      %57 = dma.vmem_to_hbm [thread:$0]  %s55, 16, %s2, [#allocation3]
    $region13: #{tpu_custom_call.1} parent=1 // pred_fallthru
      _
    // Predicated region
    $region14: #{tpu_custom_call.1} parent=1 // pred_check
      _
    $region15: #{tpu_custom_call.1} parent=1 // pred_check_branch
      %59 = sbr.rel (0) target = $region17
    $region16: #{tpu_custom_call.1} parent=1 // pred_region
      %60 = dma.done [#allocation3], 16
    $region17: #{tpu_custom_call.1} parent=1 // pred_fallthru
      _
    %61 = vsyncpa [#allocation3], 1

</llo_original>
